<compile_context>
chip_gen: v7x
topology: tpu7x:2x2x1
jax: 0.10.0
libtpu: 0.0.40
codegen_flags: <defaults>
</compile_context>

<pallas_src>
import jax
import jax.numpy as jnp
from jax import lax
from jax.experimental import pallas as pl
from jax.experimental.pallas import tpu as pltpu

BN_EPS = 1e-5


# ----------------------------- Pallas kernel ---------------------------------

def _make_basic_block_kernel(h, wd, no_relu):
    hw = h * wd

    def im2col(src_ref, patch_ref, not_first, not_last):
        # src_ref: (C, (H+2)*W + 2) -- H-padded, flattened image with 1-elem guards.
        # For output index p = r*W + c, tap (dy, dx) reads src[dy*W + dx + p],
        # which equals x_pad2d[r+dy, c+dx]; W-boundary wraparounds are masked to 0.
        c = src_ref.shape[0]
        for dy in range(3):
            for dx in range(3):
                start = dy * wd + dx
                tap = src_ref[:, start:start + hw]
                if dx == 0:
                    tap = jnp.where(not_first, tap, jnp.zeros_like(tap))
                elif dx == 2:
                    tap = jnp.where(not_last, tap, jnp.zeros_like(tap))
                k = (dy * 3 + dx) * c
                patch_ref[k:k + c, :] = tap.astype(jnp.bfloat16)
        return patch_ref[...]

    def kernel(x_ref, w1_ref, s1_ref, b1_ref, w2_ref, s2_ref, b2_ref,
               o_ref, p1_ref, p2_ref, y1_ref):
        # lane position -> output column index (for W-boundary masks)
        col = lax.broadcasted_iota(jnp.int32, (1, hw), 1) % wd
        not_first = col != 0
        not_last = col != wd - 1

        # conv1 (3x3, pad 1) + bn1 + relu: single MXU matmul, K = 9*Cin
        patch1 = im2col(x_ref, p1_ref, not_first, not_last)
        acc1 = jnp.dot(w1_ref[...], patch1, preferred_element_type=jnp.float32)
        y1 = jnp.maximum(acc1 * s1_ref[...] + b1_ref[...], 0.0)

        # stage the intermediate (bf16) into an H-padded, flattened VMEM buffer
        # so conv2 never round-trips through HBM.
        y1_ref[...] = jnp.zeros(y1_ref.shape, y1_ref.dtype)
        y1_ref[:, wd + 1:wd + 1 + hw] = y1.astype(jnp.bfloat16)

        # conv2 (3x3, pad 1) + bn2 (+ relu unless no_relu)
        patch2 = im2col(y1_ref, p2_ref, not_first, not_last)
        acc2 = jnp.dot(w2_ref[...], patch2, preferred_element_type=jnp.float32)
        y2 = acc2 * s2_ref[...] + b2_ref[...]
        if not no_relu:
            y2 = jnp.maximum(y2, 0.0)
        o_ref[...] = y2.astype(o_ref.dtype)

    return kernel


# ----------------------------- Wrapper ----------------------------------------

def _fold_conv_weight(w_oihw):
    # (Cout, Cin, 3, 3) -> (Cout, 9*Cin), K ordered tap-major (dy,dx) / cin-minor,
    # matching the im2col row order; bf16 for the MXU (f32 accumulation in-kernel).
    co, ci = w_oihw.shape[0], w_oihw.shape[1]
    return jnp.transpose(w_oihw, (0, 2, 3, 1)).reshape(co, 9 * ci).astype(jnp.bfloat16)


def _flatten_hpad(x_nchw):
    # zero-pad H by 1 on each side, flatten (H+2, W) into the lane dim, and add a
    # 1-element guard at each end so every conv tap is an in-bounds lane shift.
    n, c, h, wd = x_nchw.shape
    xh = jnp.pad(x_nchw, ((0, 0), (0, 0), (1, 1), (0, 0)))
    return jnp.pad(xh.reshape(n, c, (h + 2) * wd), ((0, 0), (0, 0), (1, 1)))


def basic_block_forward(x_nchw, params, *, no_relu=False):
    n, cin, h, wd = x_nchw.shape
    w1, s1, b1 = params["w1"], params["s1"], params["b1"]
    w2, s2, b2 = params["w2"], params["s2"], params["b2"]
    c1, c2 = w1.shape[0], w2.shape[0]
    hw = h * wd
    lpad = (h + 2) * wd + 2

    xf = _flatten_hpad(x_nchw.astype(jnp.float32))
    kernel = _make_basic_block_kernel(h, wd, no_relu)

    out = pl.pallas_call(
        kernel,
        out_shape=jax.ShapeDtypeStruct((n, c2, hw), jnp.float32),
        grid=(n,),
        in_specs=[
            pl.BlockSpec((None, cin, lpad), lambda b: (b, 0, 0)),  # x (per-batch)
            pl.BlockSpec((c1, 9 * cin), lambda b: (0, 0)),         # w1 (resident)
            pl.BlockSpec((c1, 1), lambda b: (0, 0)),               # bn1 scale
            pl.BlockSpec((c1, 1), lambda b: (0, 0)),               # bn1 bias
            pl.BlockSpec((c2, 9 * c1), lambda b: (0, 0)),          # w2 (resident)
            pl.BlockSpec((c2, 1), lambda b: (0, 0)),               # bn2 scale
            pl.BlockSpec((c2, 1), lambda b: (0, 0)),               # bn2 bias
        ],
        out_specs=pl.BlockSpec((None, c2, hw), lambda b: (b, 0, 0)),
        scratch_shapes=[
            pltpu.VMEM((9 * cin, hw), jnp.bfloat16),  # im2col buffer, conv1
            pltpu.VMEM((9 * c1, hw), jnp.bfloat16),   # im2col buffer, conv2
            pltpu.VMEM((c1, lpad), jnp.bfloat16),     # staged intermediate (H-padded)
        ],
        compiler_params=pltpu.CompilerParams(
            dimension_semantics=("parallel",),
            vmem_limit_bytes=32 * 1024 * 1024),
    )(xf,
      _fold_conv_weight(w1), s1.reshape(c1, 1), b1.reshape(c1, 1),
      _fold_conv_weight(w2), s2.reshape(c2, 1), b2.reshape(c2, 1))
    return out.reshape(n, c2, h, wd)


# ----------------------------- Reference (pure JAX) ---------------------------

def basic_block_reference(x, params, *, no_relu=False):
    def conv(x_, w_):
        return lax.conv_general_dilated(
            x_.astype(jnp.bfloat16), w_.astype(jnp.bfloat16),
            window_strides=(1, 1), padding=((1, 1), (1, 1)),
            dimension_numbers=("NCHW", "OIHW", "NCHW"),
            preferred_element_type=jnp.float32)

    y = conv(x, params["w1"])
    y = y * params["s1"][None, :, None, None] + params["b1"][None, :, None, None]
    y = jnp.maximum(y, 0.0).astype(jnp.bfloat16)
    z = conv(y, params["w2"])
    z = z * params["s2"][None, :, None, None] + params["b2"][None, :, None, None]
    if not no_relu:
        z = jnp.maximum(z, 0.0)
    return z


# ----------------------------- Parameters -------------------------------------

def _fold_bn(gamma, beta, mean, var):
    scale = gamma / jnp.sqrt(var + BN_EPS)
    return scale, beta - mean * scale


def make_params(key, inplanes, planes):
    keys = jax.random.split(key, 10)

    def bn(ks, c):
        gamma = 1.0 + 0.1 * jax.random.normal(ks[0], (c,), jnp.float32)
        beta = 0.1 * jax.random.normal(ks[1], (c,), jnp.float32)
        mean = 0.1 * jax.random.normal(ks[2], (c,), jnp.float32)
        var = 0.5 + jax.random.uniform(ks[3], (c,), jnp.float32)
        return _fold_bn(gamma, beta, mean, var)

    w1 = jax.random.normal(keys[0], (planes[0], inplanes, 3, 3), jnp.float32) \
        / (3.0 * jnp.sqrt(float(inplanes)))
    w2 = jax.random.normal(keys[1], (planes[1], planes[0], 3, 3), jnp.float32) \
        / (3.0 * jnp.sqrt(float(planes[0])))
    s1, b1 = bn(keys[2:6], planes[0])
    s2, b2 = bn(keys[6:10], planes[1])
    return dict(w1=w1, s1=s1, b1=b1, w2=w2, s2=s2, b2=b2)


# ----------------------------- Main --------------------------------------------

if __name__ == "__main__":
    key = jax.random.PRNGKey(0)
    kx, kp = jax.random.split(key)

    n, inplanes, h, wd = 2, 4, 16, 16
    planes = (8, 8)

    x = jax.random.normal(kx, (n, inplanes, h, wd), jnp.float32)
    params = make_params(kp, inplanes, planes)

    fwd = jax.jit(lambda a: basic_block_forward(a, params))
    out = fwd(x)
    jax.block_until_ready(out)

    assert out.shape == (n, planes[1], h, wd), out.shape
    assert bool(jnp.all(jnp.isfinite(out)))

    ref = jax.jit(lambda a: basic_block_reference(a, params))(x)
    err = float(jnp.max(jnp.abs(out - ref)))
    assert err < 5e-2, f"max abs err {err}"

    print("KERNEL_OK")
</pallas_src>

<mosaic_0001>
module attributes {stable_mosaic.version = 11 : i64} {
  func.func @kernel(%arg0: i32, %arg1: memref<1x4x290xf32, #tpu.memory_space<vmem>>, %arg2: memref<8x36xbf16, #tpu.memory_space<vmem>>, %arg3: memref<8x1xf32, #tpu.memory_space<vmem>>, %arg4: memref<8x1xf32, #tpu.memory_space<vmem>>, %arg5: memref<8x72xbf16, #tpu.memory_space<vmem>>, %arg6: memref<8x1xf32, #tpu.memory_space<vmem>>, %arg7: memref<8x1xf32, #tpu.memory_space<vmem>>, %arg8: memref<1x8x256xf32, #tpu.memory_space<vmem>>, %arg9: memref<36x256xbf16, #tpu.memory_space<vmem>>, %arg10: memref<72x256xbf16, #tpu.memory_space<vmem>>, %arg11: memref<8x290xbf16, #tpu.memory_space<vmem>>) attributes {dimension_semantics = [#tpu.dimension_semantics<parallel>], iteration_bounds = array<i64: 2>, scalar_prefetch = 0 : i64, scratch_operands = 3 : i64, tpu.core_type = #tpu.core_type<tc>, window_params = [{transform_indices = @transform_0, window_bounds = array<i64: 1, 4, 290>}, {pipeline_mode = #tpu.pipeline_mode<synchronous>, transform_indices = @transform_1, window_bounds = array<i64: 8, 36>}, {pipeline_mode = #tpu.pipeline_mode<synchronous>, transform_indices = @transform_2, window_bounds = array<i64: 8, 1>}, {pipeline_mode = #tpu.pipeline_mode<synchronous>, transform_indices = @transform_3, window_bounds = array<i64: 8, 1>}, {pipeline_mode = #tpu.pipeline_mode<synchronous>, transform_indices = @transform_4, window_bounds = array<i64: 8, 72>}, {pipeline_mode = #tpu.pipeline_mode<synchronous>, transform_indices = @transform_5, window_bounds = array<i64: 8, 1>}, {pipeline_mode = #tpu.pipeline_mode<synchronous>, transform_indices = @transform_6, window_bounds = array<i64: 8, 1>}, {transform_indices = @transform_7, window_bounds = array<i64: 1, 8, 256>}]} {
    %0 = tpu.iota {dimensions = array<i32: 1>} : vector<1x256xi32>
    %c16_i32 = arith.constant 16 : i32
    %c0_i32 = arith.constant 0 : i32
    %1 = arith.cmpi eq, %c16_i32, %c0_i32 : i32
    %c1_i32 = arith.constant 1 : i32
    %2 = arith.select %1, %c1_i32, %c16_i32 : i32
    %3 = vector.broadcast %2 : i32 to vector<1x256xi32>
    %4 = arith.remsi %0, %3 : vector<1x256xi32>
    %c0_i32_0 = arith.constant 0 : i32
    %5 = vector.broadcast %c0_i32_0 : i32 to vector<1x256xi32>
    %6 = arith.cmpi ne, %4, %5 : vector<1x256xi32>
    %c0_i32_1 = arith.constant 0 : i32
    %7 = vector.broadcast %c0_i32_1 : i32 to vector<1x256xi32>
    %8 = arith.cmpi slt, %4, %7 : vector<1x256xi32>
    %c0_i32_2 = arith.constant 0 : i32
    %9 = arith.cmpi slt, %2, %c0_i32_2 : i32
    %10 = vector.broadcast %9 : i1 to vector<1x256xi1>
    %11 = vector.broadcast %10 : vector<1x256xi1> to vector<1x256xi1>
    %12 = arith.xori %8, %11 : vector<1x256xi1>
    %13 = arith.andi %12, %6 : vector<1x256xi1>
    %14 = vector.broadcast %2 : i32 to vector<1x256xi32>
    %15 = arith.addi %4, %14 : vector<1x256xi32>
    %16 = arith.select %13, %15, %4 : vector<1x256xi1>, vector<1x256xi32>
    %c0_i32_3 = arith.constant 0 : i32
    %17 = vector.broadcast %c0_i32_3 : i32 to vector<1x256xi32>
    %18 = arith.cmpi ne, %16, %17 : vector<1x256xi32>
    %c15_i32 = arith.constant 15 : i32
    %19 = vector.broadcast %c15_i32 : i32 to vector<1x256xi32>
    %20 = arith.cmpi ne, %16, %19 : vector<1x256xi32>
    %c0 = arith.constant 0 : index
    %c0_4 = arith.constant 0 : index
    %c0_5 = arith.constant 0 : index
    %21 = vector.load %arg1[%c0, %c0_4, %c0_5] : memref<1x4x290xf32, #tpu.memory_space<vmem>>, vector<1x4x256xf32>
    %22 = vector.shape_cast %21 : vector<1x4x256xf32> to vector<4x256xf32>
    %cst = arith.constant 0.000000e+00 : f32
    %23 = vector.broadcast %cst : f32 to vector<4x256xf32>
    %24 = vector.shape_cast %18 : vector<1x256xi1> to vector<1x256xi1>
    %25 = vector.broadcast %24 : vector<1x256xi1> to vector<4x256xi1>
    %26 = arith.select %25, %22, %23 : vector<4x256xi1>, vector<4x256xf32>
    %27 = arith.truncf %26 : vector<4x256xf32> to vector<4x256xbf16>
    %c0_6 = arith.constant 0 : index
    %c0_7 = arith.constant 0 : index
    %28 = vector.load %arg9[%c0_6, %c0_7] : memref<36x256xbf16, #tpu.memory_space<vmem>>, vector<4x256xbf16>
    tpu.vector_store %arg9[%c0_6, %c0_7], %27 {strides = array<i32>} : memref<36x256xbf16, #tpu.memory_space<vmem>>, vector<4x256xbf16>,
    %c0_8 = arith.constant 0 : index
    %c0_9 = arith.constant 0 : index
    %c1 = arith.constant 1 : index
    %29 = vector.load %arg1[%c0_8, %c0_9, %c1] : memref<1x4x290xf32, #tpu.memory_space<vmem>>, vector<1x4x256xf32>
    %30 = vector.shape_cast %29 : vector<1x4x256xf32> to vector<4x256xf32>
    %31 = arith.truncf %30 : vector<4x256xf32> to vector<4x256xbf16>
    %c4 = arith.constant 4 : index
    %c0_10 = arith.constant 0 : index
    %32 = vector.load %arg9[%c4, %c0_10] : memref<36x256xbf16, #tpu.memory_space<vmem>>, vector<4x256xbf16>
    tpu.vector_store %arg9[%c4, %c0_10], %31 {strides = array<i32>} : memref<36x256xbf16, #tpu.memory_space<vmem>>, vector<4x256xbf16>,
    %c0_11 = arith.constant 0 : index
    %c0_12 = arith.constant 0 : index
    %c2 = arith.constant 2 : index
    %33 = vector.load %arg1[%c0_11, %c0_12, %c2] : memref<1x4x290xf32, #tpu.memory_space<vmem>>, vector<1x4x256xf32>
    %34 = vector.shape_cast %33 : vector<1x4x256xf32> to vector<4x256xf32>
    %cst_13 = arith.constant 0.000000e+00 : f32
    %35 = vector.broadcast %cst_13 : f32 to vector<4x256xf32>
    %36 = vector.shape_cast %20 : vector<1x256xi1> to vector<1x256xi1>
    %37 = vector.broadcast %36 : vector<1x256xi1> to vector<4x256xi1>
    %38 = arith.select %37, %34, %35 : vector<4x256xi1>, vector<4x256xf32>
    %39 = arith.truncf %38 : vector<4x256xf32> to vector<4x256xbf16>
    %c8 = arith.constant 8 : index
    %c0_14 = arith.constant 0 : index
    %40 = vector.load %arg9[%c8, %c0_14] : memref<36x256xbf16, #tpu.memory_space<vmem>>, vector<4x256xbf16>
    tpu.vector_store %arg9[%c8, %c0_14], %39 {strides = array<i32>} : memref<36x256xbf16, #tpu.memory_space<vmem>>, vector<4x256xbf16>,
    %c0_15 = arith.constant 0 : index
    %c0_16 = arith.constant 0 : index
    %c16 = arith.constant 16 : index
    %41 = vector.load %arg1[%c0_15, %c0_16, %c16] : memref<1x4x290xf32, #tpu.memory_space<vmem>>, vector<1x4x256xf32>
    %42 = vector.shape_cast %41 : vector<1x4x256xf32> to vector<4x256xf32>
    %cst_17 = arith.constant 0.000000e+00 : f32
    %43 = vector.broadcast %cst_17 : f32 to vector<4x256xf32>
    %44 = vector.shape_cast %18 : vector<1x256xi1> to vector<1x256xi1>
    %45 = vector.broadcast %44 : vector<1x256xi1> to vector<4x256xi1>
    %46 = arith.select %45, %42, %43 : vector<4x256xi1>, vector<4x256xf32>
    %47 = arith.truncf %46 : vector<4x256xf32> to vector<4x256xbf16>
    %c12 = arith.constant 12 : index
    %c0_18 = arith.constant 0 : index
    %48 = vector.load %arg9[%c12, %c0_18] : memref<36x256xbf16, #tpu.memory_space<vmem>>, vector<4x256xbf16>
    tpu.vector_store %arg9[%c12, %c0_18], %47 {strides = array<i32>} : memref<36x256xbf16, #tpu.memory_space<vmem>>, vector<4x256xbf16>,
    %c0_19 = arith.constant 0 : index
    %c0_20 = arith.constant 0 : index
    %c17 = arith.constant 17 : index
    %49 = vector.load %arg1[%c0_19, %c0_20, %c17] : memref<1x4x290xf32, #tpu.memory_space<vmem>>, vector<1x4x256xf32>
    %50 = vector.shape_cast %49 : vector<1x4x256xf32> to vector<4x256xf32>
    %51 = arith.truncf %50 : vector<4x256xf32> to vector<4x256xbf16>
    %c16_21 = arith.constant 16 : index
    %c0_22 = arith.constant 0 : index
    %52 = vector.load %arg9[%c16_21, %c0_22] : memref<36x256xbf16, #tpu.memory_space<vmem>>, vector<4x256xbf16>
    tpu.vector_store %arg9[%c16_21, %c0_22], %51 {strides = array<i32>} : memref<36x256xbf16, #tpu.memory_space<vmem>>, vector<4x256xbf16>,
    %c0_23 = arith.constant 0 : index
    %c0_24 = arith.constant 0 : index
    %c18 = arith.constant 18 : index
    %53 = vector.load %arg1[%c0_23, %c0_24, %c18] : memref<1x4x290xf32, #tpu.memory_space<vmem>>, vector<1x4x256xf32>
    %54 = vector.shape_cast %53 : vector<1x4x256xf32> to vector<4x256xf32>
    %cst_25 = arith.constant 0.000000e+00 : f32
    %55 = vector.broadcast %cst_25 : f32 to vector<4x256xf32>
    %56 = vector.shape_cast %20 : vector<1x256xi1> to vector<1x256xi1>
    %57 = vector.broadcast %56 : vector<1x256xi1> to vector<4x256xi1>
    %58 = arith.select %57, %54, %55 : vector<4x256xi1>, vector<4x256xf32>
    %59 = arith.truncf %58 : vector<4x256xf32> to vector<4x256xbf16>
    %c20 = arith.constant 20 : index
    %c0_26 = arith.constant 0 : index
    %60 = vector.load %arg9[%c20, %c0_26] : memref<36x256xbf16, #tpu.memory_space<vmem>>, vector<4x256xbf16>
    tpu.vector_store %arg9[%c20, %c0_26], %59 {strides = array<i32>} : memref<36x256xbf16, #tpu.memory_space<vmem>>, vector<4x256xbf16>,
    %c0_27 = arith.constant 0 : index
    %c0_28 = arith.constant 0 : index
    %c32 = arith.constant 32 : index
    %61 = vector.load %arg1[%c0_27, %c0_28, %c32] : memref<1x4x290xf32, #tpu.memory_space<vmem>>, vector<1x4x256xf32>
    %62 = vector.shape_cast %61 : vector<1x4x256xf32> to vector<4x256xf32>
    %cst_29 = arith.constant 0.000000e+00 : f32
    %63 = vector.broadcast %cst_29 : f32 to vector<4x256xf32>
    %64 = vector.shape_cast %18 : vector<1x256xi1> to vector<1x256xi1>
    %65 = vector.broadcast %64 : vector<1x256xi1> to vector<4x256xi1>
    %66 = arith.select %65, %62, %63 : vector<4x256xi1>, vector<4x256xf32>
    %67 = arith.truncf %66 : vector<4x256xf32> to vector<4x256xbf16>
    %c24 = arith.constant 24 : index
    %c0_30 = arith.constant 0 : index
    %68 = vector.load %arg9[%c24, %c0_30] : memref<36x256xbf16, #tpu.memory_space<vmem>>, vector<4x256xbf16>
    tpu.vector_store %arg9[%c24, %c0_30], %67 {strides = array<i32>} : memref<36x256xbf16, #tpu.memory_space<vmem>>, vector<4x256xbf16>,
    %c0_31 = arith.constant 0 : index
    %c0_32 = arith.constant 0 : index
    %c33 = arith.constant 33 : index
    %69 = vector.load %arg1[%c0_31, %c0_32, %c33] : memref<1x4x290xf32, #tpu.memory_space<vmem>>, vector<1x4x256xf32>
    %70 = vector.shape_cast %69 : vector<1x4x256xf32> to vector<4x256xf32>
    %71 = arith.truncf %70 : vector<4x256xf32> to vector<4x256xbf16>
    %c28 = arith.constant 28 : index
    %c0_33 = arith.constant 0 : index
    %72 = vector.load %arg9[%c28, %c0_33] : memref<36x256xbf16, #tpu.memory_space<vmem>>, vector<4x256xbf16>
    tpu.vector_store %arg9[%c28, %c0_33], %71 {strides = array<i32>} : memref<36x256xbf16, #tpu.memory_space<vmem>>, vector<4x256xbf16>,
    %c0_34 = arith.constant 0 : index
    %c0_35 = arith.constant 0 : index
    %c34 = arith.constant 34 : index
    %73 = vector.load %arg1[%c0_34, %c0_35, %c34] : memref<1x4x290xf32, #tpu.memory_space<vmem>>, vector<1x4x256xf32>
    %74 = vector.shape_cast %73 : vector<1x4x256xf32> to vector<4x256xf32>
    %cst_36 = arith.constant 0.000000e+00 : f32
    %75 = vector.broadcast %cst_36 : f32 to vector<4x256xf32>
    %76 = vector.shape_cast %20 : vector<1x256xi1> to vector<1x256xi1>
    %77 = vector.broadcast %76 : vector<1x256xi1> to vector<4x256xi1>
    %78 = arith.select %77, %74, %75 : vector<4x256xi1>, vector<4x256xf32>
    %79 = arith.truncf %78 : vector<4x256xf32> to vector<4x256xbf16>
    %c32_37 = arith.constant 32 : index
    %c0_38 = arith.constant 0 : index
    %80 = vector.load %arg9[%c32_37, %c0_38] : memref<36x256xbf16, #tpu.memory_space<vmem>>, vector<4x256xbf16>
    tpu.vector_store %arg9[%c32_37, %c0_38], %79 {strides = array<i32>} : memref<36x256xbf16, #tpu.memory_space<vmem>>, vector<4x256xbf16>,
    %c0_39 = arith.constant 0 : index
    %c0_40 = arith.constant 0 : index
    %81 = vector.load %arg9[%c0_39, %c0_40] : memref<36x256xbf16, #tpu.memory_space<vmem>>, vector<36x256xbf16>
    %c0_41 = arith.constant 0 : index
    %c0_42 = arith.constant 0 : index
    %82 = vector.load %arg2[%c0_41, %c0_42] : memref<8x36xbf16, #tpu.memory_space<vmem>>, vector<8x36xbf16>
    %cst_43 = arith.constant dense<0.000000e+00> : vector<8x256xf32>
    %83 = tpu.matmul %82, %81, %cst_43 {dimension_numbers = #tpu.dot_dimension_numbers<[1], [0], [0], [1], [0, 0, 1, 1], [], []>} : vector<8x36xbf16>, vector<36x256xbf16>, vector<8x256xf32> -> vector<8x256xf32>
    %c0_44 = arith.constant 0 : index
    %c0_45 = arith.constant 0 : index
    %84 = vector.load %arg3[%c0_44, %c0_45] : memref<8x1xf32, #tpu.memory_space<vmem>>, vector<8x1xf32>
    %85 = vector.broadcast %84 : vector<8x1xf32> to vector<8x256xf32>
    %86 = arith.mulf %83, %85 : vector<8x256xf32>
    %c0_46 = arith.constant 0 : index
    %c0_47 = arith.constant 0 : index
    %87 = vector.load %arg4[%c0_46, %c0_47] : memref<8x1xf32, #tpu.memory_space<vmem>>, vector<8x1xf32>
    %88 = vector.broadcast %87 : vector<8x1xf32> to vector<8x256xf32>
    %89 = arith.addf %86, %88 : vector<8x256xf32>
    %cst_48 = arith.constant 0.000000e+00 : f32
    %90 = vector.broadcast %cst_48 : f32 to vector<8x256xf32>
    %91 = arith.maximumf %89, %90 : vector<8x256xf32>
    %cst_49 = arith.constant 0.000000e+00 : bf16
    %92 = vector.broadcast %cst_49 : bf16 to vector<8x290xbf16>
    %c0_50 = arith.constant 0 : index
    %c0_51 = arith.constant 0 : index
    %93 = vector.load %arg11[%c0_50, %c0_51] : memref<8x290xbf16, #tpu.memory_space<vmem>>, vector<8x290xbf16>
    tpu.vector_store %arg11[%c0_50, %c0_51], %92 {strides = array<i32>} : memref<8x290xbf16, #tpu.memory_space<vmem>>, vector<8x290xbf16>,
    %94 = arith.truncf %91 : vector<8x256xf32> to vector<8x256xbf16>
    %c0_52 = arith.constant 0 : index
    %c17_53 = arith.constant 17 : index
    %95 = vector.load %arg11[%c0_52, %c17_53] : memref<8x290xbf16, #tpu.memory_space<vmem>>, vector<8x256xbf16>
    tpu.vector_store %arg11[%c0_52, %c17_53], %94 {strides = array<i32>} : memref<8x290xbf16, #tpu.memory_space<vmem>>, vector<8x256xbf16>,
    %c0_54 = arith.constant 0 : index
    %c0_55 = arith.constant 0 : index
    %96 = vector.load %arg11[%c0_54, %c0_55] : memref<8x290xbf16, #tpu.memory_space<vmem>>, vector<8x256xbf16>
    %cst_56 = arith.constant 0.000000e+00 : bf16
    %97 = vector.broadcast %cst_56 : bf16 to vector<8x256xbf16>
    %98 = vector.shape_cast %18 : vector<1x256xi1> to vector<1x256xi1>
    %99 = vector.broadcast %98 : vector<1x256xi1> to vector<8x256xi1>
    %100 = arith.select %99, %96, %97 : vector<8x256xi1>, vector<8x256xbf16>
    %c0_57 = arith.constant 0 : index
    %c0_58 = arith.constant 0 : index
    %101 = vector.load %arg10[%c0_57, %c0_58] : memref<72x256xbf16, #tpu.memory_space<vmem>>, vector<8x256xbf16>
    tpu.vector_store %arg10[%c0_57, %c0_58], %100 {strides = array<i32>} : memref<72x256xbf16, #tpu.memory_space<vmem>>, vector<8x256xbf16>,
    %c0_59 = arith.constant 0 : index
    %c1_60 = arith.constant 1 : index
    %102 = vector.load %arg11[%c0_59, %c1_60] : memref<8x290xbf16, #tpu.memory_space<vmem>>, vector<8x256xbf16>
    %c8_61 = arith.constant 8 : index
    %c0_62 = arith.constant 0 : index
    %103 = vector.load %arg10[%c8_61, %c0_62] : memref<72x256xbf16, #tpu.memory_space<vmem>>, vector<8x256xbf16>
    tpu.vector_store %arg10[%c8_61, %c0_62], %102 {strides = array<i32>} : memref<72x256xbf16, #tpu.memory_space<vmem>>, vector<8x256xbf16>,
    %c0_63 = arith.constant 0 : index
    %c2_64 = arith.constant 2 : index
    %104 = vector.load %arg11[%c0_63, %c2_64] : memref<8x290xbf16, #tpu.memory_space<vmem>>, vector<8x256xbf16>
    %cst_65 = arith.constant 0.000000e+00 : bf16
    %105 = vector.broadcast %cst_65 : bf16 to vector<8x256xbf16>
    %106 = vector.shape_cast %20 : vector<1x256xi1> to vector<1x256xi1>
    %107 = vector.broadcast %106 : vector<1x256xi1> to vector<8x256xi1>
    %108 = arith.select %107, %104, %105 : vector<8x256xi1>, vector<8x256xbf16>
    %c16_66 = arith.constant 16 : index
    %c0_67 = arith.constant 0 : index
    %109 = vector.load %arg10[%c16_66, %c0_67] : memref<72x256xbf16, #tpu.memory_space<vmem>>, vector<8x256xbf16>
    tpu.vector_store %arg10[%c16_66, %c0_67], %108 {strides = array<i32>} : memref<72x256xbf16, #tpu.memory_space<vmem>>, vector<8x256xbf16>,
    %c0_68 = arith.constant 0 : index
    %c16_69 = arith.constant 16 : index
    %110 = vector.load %arg11[%c0_68, %c16_69] : memref<8x290xbf16, #tpu.memory_space<vmem>>, vector<8x256xbf16>
    %cst_70 = arith.constant 0.000000e+00 : bf16
    %111 = vector.broadcast %cst_70 : bf16 to vector<8x256xbf16>
    %112 = vector.shape_cast %18 : vector<1x256xi1> to vector<1x256xi1>
    %113 = vector.broadcast %112 : vector<1x256xi1> to vector<8x256xi1>
    %114 = arith.select %113, %110, %111 : vector<8x256xi1>, vector<8x256xbf16>
    %c24_71 = arith.constant 24 : index
    %c0_72 = arith.constant 0 : index
    %115 = vector.load %arg10[%c24_71, %c0_72] : memref<72x256xbf16, #tpu.memory_space<vmem>>, vector<8x256xbf16>
    tpu.vector_store %arg10[%c24_71, %c0_72], %114 {strides = array<i32>} : memref<72x256xbf16, #tpu.memory_space<vmem>>, vector<8x256xbf16>,
    %c0_73 = arith.constant 0 : index
    %c17_74 = arith.constant 17 : index
    %116 = vector.load %arg11[%c0_73, %c17_74] : memref<8x290xbf16, #tpu.memory_space<vmem>>, vector<8x256xbf16>
    %c32_75 = arith.constant 32 : index
    %c0_76 = arith.constant 0 : index
    %117 = vector.load %arg10[%c32_75, %c0_76] : memref<72x256xbf16, #tpu.memory_space<vmem>>, vector<8x256xbf16>
    tpu.vector_store %arg10[%c32_75, %c0_76], %116 {strides = array<i32>} : memref<72x256xbf16, #tpu.memory_space<vmem>>, vector<8x256xbf16>,
    %c0_77 = arith.constant 0 : index
    %c18_78 = arith.constant 18 : index
    %118 = vector.load %arg11[%c0_77, %c18_78] : memref<8x290xbf16, #tpu.memory_space<vmem>>, vector<8x256xbf16>
    %cst_79 = arith.constant 0.000000e+00 : bf16
    %119 = vector.broadcast %cst_79 : bf16 to vector<8x256xbf16>
    %120 = vector.shape_cast %20 : vector<1x256xi1> to vector<1x256xi1>
    %121 = vector.broadcast %120 : vector<1x256xi1> to vector<8x256xi1>
    %122 = arith.select %121, %118, %119 : vector<8x256xi1>, vector<8x256xbf16>
    %c40 = arith.constant 40 : index
    %c0_80 = arith.constant 0 : index
    %123 = vector.load %arg10[%c40, %c0_80] : memref<72x256xbf16, #tpu.memory_space<vmem>>, vector<8x256xbf16>
    tpu.vector_store %arg10[%c40, %c0_80], %122 {strides = array<i32>} : memref<72x256xbf16, #tpu.memory_space<vmem>>, vector<8x256xbf16>,
    %c0_81 = arith.constant 0 : index
    %c32_82 = arith.constant 32 : index
    %124 = vector.load %arg11[%c0_81, %c32_82] : memref<8x290xbf16, #tpu.memory_space<vmem>>, vector<8x256xbf16>
    %cst_83 = arith.constant 0.000000e+00 : bf16
    %125 = vector.broadcast %cst_83 : bf16 to vector<8x256xbf16>
    %126 = vector.shape_cast %18 : vector<1x256xi1> to vector<1x256xi1>
    %127 = vector.broadcast %126 : vector<1x256xi1> to vector<8x256xi1>
    %128 = arith.select %127, %124, %125 : vector<8x256xi1>, vector<8x256xbf16>
    %c48 = arith.constant 48 : index
    %c0_84 = arith.constant 0 : index
    %129 = vector.load %arg10[%c48, %c0_84] : memref<72x256xbf16, #tpu.memory_space<vmem>>, vector<8x256xbf16>
    tpu.vector_store %arg10[%c48, %c0_84], %128 {strides = array<i32>} : memref<72x256xbf16, #tpu.memory_space<vmem>>, vector<8x256xbf16>,
    %c0_85 = arith.constant 0 : index
    %c33_86 = arith.constant 33 : index
    %130 = vector.load %arg11[%c0_85, %c33_86] : memref<8x290xbf16, #tpu.memory_space<vmem>>, vector<8x256xbf16>
    %c56 = arith.constant 56 : index
    %c0_87 = arith.constant 0 : index
    %131 = vector.load %arg10[%c56, %c0_87] : memref<72x256xbf16, #tpu.memory_space<vmem>>, vector<8x256xbf16>
    tpu.vector_store %arg10[%c56, %c0_87], %130 {strides = array<i32>} : memref<72x256xbf16, #tpu.memory_space<vmem>>, vector<8x256xbf16>,
    %c0_88 = arith.constant 0 : index
    %c34_89 = arith.constant 34 : index
    %132 = vector.load %arg11[%c0_88, %c34_89] : memref<8x290xbf16, #tpu.memory_space<vmem>>, vector<8x256xbf16>
    %cst_90 = arith.constant 0.000000e+00 : bf16
    %133 = vector.broadcast %cst_90 : bf16 to vector<8x256xbf16>
    %134 = vector.shape_cast %20 : vector<1x256xi1> to vector<1x256xi1>
    %135 = vector.broadcast %134 : vector<1x256xi1> to vector<8x256xi1>
    %136 = arith.select %135, %132, %133 : vector<8x256xi1>, vector<8x256xbf16>
    %c64 = arith.constant 64 : index
    %c0_91 = arith.constant 0 : index
    %137 = vector.load %arg10[%c64, %c0_91] : memref<72x256xbf16, #tpu.memory_space<vmem>>, vector<8x256xbf16>
    tpu.vector_store %arg10[%c64, %c0_91], %136 {strides = array<i32>} : memref<72x256xbf16, #tpu.memory_space<vmem>>, vector<8x256xbf16>,
    %c0_92 = arith.constant 0 : index
    %c0_93 = arith.constant 0 : index
    %138 = vector.load %arg10[%c0_92, %c0_93] : memref<72x256xbf16, #tpu.memory_space<vmem>>, vector<72x256xbf16>
    %c0_94 = arith.constant 0 : index
    %c0_95 = arith.constant 0 : index
    %139 = vector.load %arg5[%c0_94, %c0_95] : memref<8x72xbf16, #tpu.memory_space<vmem>>, vector<8x72xbf16>
    %cst_96 = arith.constant dense<0.000000e+00> : vector<8x256xf32>
    %140 = tpu.matmul %139, %138, %cst_96 {dimension_numbers = #tpu.dot_dimension_numbers<[1], [0], [0], [1], [0, 0, 1, 1], [], []>} : vector<8x72xbf16>, vector<72x256xbf16>, vector<8x256xf32> -> vector<8x256xf32>
    %c0_97 = arith.constant 0 : index
    %c0_98 = arith.constant 0 : index
    %141 = vector.load %arg6[%c0_97, %c0_98] : memref<8x1xf32, #tpu.memory_space<vmem>>, vector<8x1xf32>
    %142 = vector.broadcast %141 : vector<8x1xf32> to vector<8x256xf32>
    %143 = arith.mulf %140, %142 : vector<8x256xf32>
    %c0_99 = arith.constant 0 : index
    %c0_100 = arith.constant 0 : index
    %144 = vector.load %arg7[%c0_99, %c0_100] : memref<8x1xf32, #tpu.memory_space<vmem>>, vector<8x1xf32>
    %145 = vector.broadcast %144 : vector<8x1xf32> to vector<8x256xf32>
    %146 = arith.addf %143, %145 : vector<8x256xf32>
    %cst_101 = arith.constant 0.000000e+00 : f32
    %147 = vector.broadcast %cst_101 : f32 to vector<8x256xf32>
    %148 = arith.maximumf %146, %147 : vector<8x256xf32>
    %c0_102 = arith.constant 0 : index
    %c0_103 = arith.constant 0 : index
    %c0_104 = arith.constant 0 : index
    %149 = vector.load %arg8[%c0_102, %c0_103, %c0_104] : memref<1x8x256xf32, #tpu.memory_space<vmem>>, vector<1x8x256xf32>
    %150 = vector.shape_cast %149 : vector<1x8x256xf32> to vector<8x256xf32>
    %151 = vector.shape_cast %148 : vector<8x256xf32> to vector<1x8x256xf32>
    tpu.vector_store %arg8[%c0_102, %c0_103, %c0_104], %151 {strides = array<i32>} : memref<1x8x256xf32, #tpu.memory_space<vmem>>, vector<1x8x256xf32>,
    return
  }
  func.func @transform_0(%arg0: i32) -> (i32, i32, i32) {
    %c0_i32 = arith.constant 0 : i32
    %c0_i32_0 = arith.constant 0 : i32
    %c0_i32_1 = arith.constant 0 : i32
    return %arg0, %c0_i32, %c0_i32_0 : i32, i32, i32
  }
  func.func @transform_1(%arg0: i32) -> (i32, i32) {
    %c0_i32 = arith.constant 0 : i32
    %c0_i32_0 = arith.constant 0 : i32
    %c0_i32_1 = arith.constant 0 : i32
    return %c0_i32, %c0_i32_0 : i32, i32
  }
  func.func @transform_2(%arg0: i32) -> (i32, i32) {
    %c0_i32 = arith.constant 0 : i32
    %c0_i32_0 = arith.constant 0 : i32
    %c0_i32_1 = arith.constant 0 : i32
    return %c0_i32, %c0_i32_0 : i32, i32
  }
  func.func @transform_3(%arg0: i32) -> (i32, i32) {
    %c0_i32 = arith.constant 0 : i32
    %c0_i32_0 = arith.constant 0 : i32
    %c0_i32_1 = arith.constant 0 : i32
    return %c0_i32, %c0_i32_0 : i32, i32
  }
  func.func @transform_4(%arg0: i32) -> (i32, i32) {
    %c0_i32 = arith.constant 0 : i32
    %c0_i32_0 = arith.constant 0 : i32
    %c0_i32_1 = arith.constant 0 : i32
    return %c0_i32, %c0_i32_0 : i32, i32
  }
  func.func @transform_5(%arg0: i32) -> (i32, i32) {
    %c0_i32 = arith.constant 0 : i32
    %c0_i32_0 = arith.constant 0 : i32
    %c0_i32_1 = arith.constant 0 : i32
    return %c0_i32, %c0_i32_0 : i32, i32
  }
  func.func @transform_6(%arg0: i32) -> (i32, i32) {
    %c0_i32 = arith.constant 0 : i32
    %c0_i32_0 = arith.constant 0 : i32
    %c0_i32_1 = arith.constant 0 : i32
    return %c0_i32, %c0_i32_0 : i32, i32
  }
  func.func @transform_7(%arg0: i32) -> (i32, i32, i32) {
    %c0_i32 = arith.constant 0 : i32
    %c0_i32_0 = arith.constant 0 : i32
    %c0_i32_1 = arith.constant 0 : i32
    return %arg0, %c0_i32, %c0_i32_0 : i32, i32, i32
  }
}

</mosaic_0001>

<llo_original>
// kernel: _lambda_.1
$region0: #{_lambda_.1}
  #allocation0 [shape = 'u32[]', space=smem, size = 0x4, offset = 0x4, fixed_abs, tag = 'smem constant byte address 0x4 - core index']
  #allocation1 [shape = 'u32[144,128]{1,0:T(1,128)}', space=vmem, size = 0x12000, scoped, tag = 'internal scratch']
  #allocation2 [shape = 'bf16[36,256]{1,0:T(8,128)(2,1)}', space=vmem, size = 0x5000, scoped, tag = 'scratch operand']
  #allocation3 [shape = 'bf16[72,256]{1,0:T(8,128)(2,1)}', space=vmem, size = 0x9000, scoped, tag = 'scratch operand']
  #allocation4 [shape = 'bf16[8,290]{1,0:T(8,128)(2,1)}', space=vmem, size = 0x1800, scoped, tag = 'scratch operand']
  %s0 = inlined_call_operand.vmem [shape: f32[2,4,290], index: 0, kind: input, shape index: {}]
  %s1 = inlined_call_operand.vmem [shape: bf16[8,36], index: 1, kind: input, shape index: {}]
  %s2 = inlined_call_operand.vmem [shape: f32[8,1], index: 2, kind: input, shape index: {}]
  %s3 = inlined_call_operand.vmem [shape: f32[8,1], index: 3, kind: input, shape index: {}]
  %s4 = inlined_call_operand.vmem [shape: bf16[8,72], index: 4, kind: input, shape index: {}]
  %s5 = inlined_call_operand.vmem [shape: f32[8,1], index: 5, kind: input, shape index: {}]
  %s6 = inlined_call_operand.vmem [shape: f32[8,1], index: 6, kind: input, shape index: {}]
  %s7 = inlined_call_operand.vmem [shape: f32[2,8,256], index: 7, kind: output, shape index: {}]
  %s8 = sld [smem:[#allocation0]]
  $region61: #{_lambda_.1} parent=0
    _
  %s10 = ssub.s32 1, %s8
  %s11 = scalar_select 0, %s10, %s8
  loop: start=0, step=1, limit=4
  $region2: #{_lambda_.1} parent=0 // loop_pre_header
    _
  $region3: #{_lambda_.1} parent=0 // loop_header
    %s13 = sphi 0, %s17
    %p14 = scmp.ge.s32.totalorder %s13, 4
    %s23 = sphi 0, %s25
    %s26 = sphi 0, %s23
    %s27 = sphi 0, %s26
    %s43 = sphi 0, %s27
    %s47 = sphi 0, %s47
    %s49 = sphi 0, %s47
    %s50 = sphi 0, %s49
    %s64 = sphi 0, %s50
    %s68 = sphi 0, %s68
    %s70 = sphi 0, %s68
    %s71 = sphi 0, %s70
    %s85 = sphi 0, %s71
    %s89 = sphi 0, %s89
    %s91 = sphi 0, %s89
    %s92 = sphi 0, %s91
    %s106 = sphi 0, %s92
    %s110 = sphi 0, %s110
    %s112 = sphi 0, %s110
    %s113 = sphi 0, %s112
    %s127 = sphi 0, %s113
    %s131 = sphi 0, %s131
    %s133 = sphi 0, %s131
    %s134 = sphi 0, %s133
    %s148 = sphi 0, %s134
    %s152 = sphi 0, %s152
    %s154 = sphi 0, %s152
    %s155 = sphi 0, %s154
    %s169 = sphi 0, %s155
    %s175 = sphi 0, %s177
    %s178 = sphi 0, %s175
    %s179 = sphi 0, %s178
    %s195 = sphi 0, %s179
  $region4: #{_lambda_.1} parent=0 // loop_header_branch
    %16 = sbr.rel (%p14) target = $region8
  $region5: #{_lambda_.1} parent=0 // loop_body
    %s18 = ssub.s32 %s13, 1
    %s19 = ssub.s32 %s13, 2
    %s20 = sadd.s32 %s13, 1
    %s21 = ssub.s32 %s13, %s20
    %p22 = scmp.eq.s32.totalorder %s21, 0
    %s24 = sadd.s32 %s23, 1
    %s25 = scalar_select %p22, %s23, %s24
    %p28 = pneg %p22
    %p29 = scmp.eq.s32.totalorder %s13, 1
    %p30 = por %p28, %p29
    %p31 = scmp.ne.s32.totalorder %s23, %s26
    %p32 = scmp.eq.s32.totalorder %s13, 0
    %p33 = por %p31, %p32
    %p34 = scmp.ne.s32.totalorder %s23, %s26
    %p35 = scmp.eq.s32.totalorder %s18, 1
    %p36 = por %p34, %p35
    %p37 = scmp.ne.s32.totalorder %s26, %s27
    %p38 = scmp.eq.s32.totalorder %s18, 0
    %p39 = por %p37, %p38
    %p40 = scmp.ne.s32.totalorder %s26, %s27
    %p41 = scmp.eq.s32.totalorder %s19, 1
    %p42 = por %p40, %p41
    %p44 = scmp.ne.s32.totalorder %s27, %s43
    %p45 = scmp.eq.s32.totalorder %s19, 0
    %p46 = por %p44, %p45
    %s48 = sadd.s32 %s47, 1
    %p51 = scmp.eq.s32.totalorder %s13, 1
    %p52 = scmp.ne.s32.totalorder %s47, %s49
    %p53 = scmp.eq.s32.totalorder %s13, 0
    %p54 = por %p52, %p53
    %p55 = scmp.ne.s32.totalorder %s47, %s49
    %p56 = scmp.eq.s32.totalorder %s18, 1
    %p57 = por %p55, %p56
    %p58 = scmp.ne.s32.totalorder %s49, %s50
    %p59 = scmp.eq.s32.totalorder %s18, 0
    %p60 = por %p58, %p59
    %p61 = scmp.ne.s32.totalorder %s49, %s50
    %p62 = scmp.eq.s32.totalorder %s19, 1
    %p63 = por %p61, %p62
    %p65 = scmp.ne.s32.totalorder %s50, %s64
    %p66 = scmp.eq.s32.totalorder %s19, 0
    %p67 = por %p65, %p66
    %s69 = sadd.s32 %s68, 1
    %p72 = scmp.eq.s32.totalorder %s13, 1
    %p73 = scmp.ne.s32.totalorder %s68, %s70
    %p74 = scmp.eq.s32.totalorder %s13, 0
    %p75 = por %p73, %p74
    %p76 = scmp.ne.s32.totalorder %s68, %s70
    %p77 = scmp.eq.s32.totalorder %s18, 1
    %p78 = por %p76, %p77
    %p79 = scmp.ne.s32.totalorder %s70, %s71
    %p80 = scmp.eq.s32.totalorder %s18, 0
    %p81 = por %p79, %p80
    %p82 = scmp.ne.s32.totalorder %s70, %s71
    %p83 = scmp.eq.s32.totalorder %s19, 1
    %p84 = por %p82, %p83
    %p86 = scmp.ne.s32.totalorder %s71, %s85
    %p87 = scmp.eq.s32.totalorder %s19, 0
    %p88 = por %p86, %p87
    %s90 = sadd.s32 %s89, 1
    %p93 = scmp.eq.s32.totalorder %s13, 1
    %p94 = scmp.ne.s32.totalorder %s89, %s91
    %p95 = scmp.eq.s32.totalorder %s13, 0
    %p96 = por %p94, %p95
    %p97 = scmp.ne.s32.totalorder %s89, %s91
    %p98 = scmp.eq.s32.totalorder %s18, 1
    %p99 = por %p97, %p98
    %p100 = scmp.ne.s32.totalorder %s91, %s92
    %p101 = scmp.eq.s32.totalorder %s18, 0
    %p102 = por %p100, %p101
    %p103 = scmp.ne.s32.totalorder %s91, %s92
    %p104 = scmp.eq.s32.totalorder %s19, 1
    %p105 = por %p103, %p104
    %p107 = scmp.ne.s32.totalorder %s92, %s106
    %p108 = scmp.eq.s32.totalorder %s19, 0
    %p109 = por %p107, %p108
    %s111 = sadd.s32 %s110, 1
    %p114 = scmp.eq.s32.totalorder %s13, 1
    %p115 = scmp.ne.s32.totalorder %s110, %s112
    %p116 = scmp.eq.s32.totalorder %s13, 0
    %p117 = por %p115, %p116
    %p118 = scmp.ne.s32.totalorder %s110, %s112
    %p119 = scmp.eq.s32.totalorder %s18, 1
    %p120 = por %p118, %p119
    %p121 = scmp.ne.s32.totalorder %s112, %s113
    %p122 = scmp.eq.s32.totalorder %s18, 0
    %p123 = por %p121, %p122
    %p124 = scmp.ne.s32.totalorder %s112, %s113
    %p125 = scmp.eq.s32.totalorder %s19, 1
    %p126 = por %p124, %p125
    %p128 = scmp.ne.s32.totalorder %s113, %s127
    %p129 = scmp.eq.s32.totalorder %s19, 0
    %p130 = por %p128, %p129
    %s132 = sadd.s32 %s131, 1
    %p135 = scmp.eq.s32.totalorder %s13, 1
    %p136 = scmp.ne.s32.totalorder %s131, %s133
    %p137 = scmp.eq.s32.totalorder %s13, 0
    %p138 = por %p136, %p137
    %p139 = scmp.ne.s32.totalorder %s131, %s133
    %p140 = scmp.eq.s32.totalorder %s18, 1
    %p141 = por %p139, %p140
    %p142 = scmp.ne.s32.totalorder %s133, %s134
    %p143 = scmp.eq.s32.totalorder %s18, 0
    %p144 = por %p142, %p143
    %p145 = scmp.ne.s32.totalorder %s133, %s134
    %p146 = scmp.eq.s32.totalorder %s19, 1
    %p147 = por %p145, %p146
    %p149 = scmp.ne.s32.totalorder %s134, %s148
    %p150 = scmp.eq.s32.totalorder %s19, 0
    %p151 = por %p149, %p150
    %s153 = sadd.s32 %s152, 1
    %p156 = scmp.eq.s32.totalorder %s13, 1
    %p157 = scmp.ne.s32.totalorder %s152, %s154
    %p158 = scmp.eq.s32.totalorder %s13, 0
    %p159 = por %p157, %p158
    %p160 = scmp.ne.s32.totalorder %s152, %s154
    %p161 = scmp.eq.s32.totalorder %s18, 1
    %p162 = por %p160, %p161
    %p163 = scmp.ne.s32.totalorder %s154, %s155
    %p164 = scmp.eq.s32.totalorder %s18, 0
    %p165 = por %p163, %p164
    %p166 = scmp.ne.s32.totalorder %s154, %s155
    %p167 = scmp.eq.s32.totalorder %s19, 1
    %p168 = por %p166, %p167
    %p170 = scmp.ne.s32.totalorder %s155, %s169
    %p171 = scmp.eq.s32.totalorder %s19, 0
    %p172 = por %p170, %p171
    %s173 = ssub.s32 %s13, %s20
    %p174 = scmp.eq.s32.totalorder %s173, 0
    %s176 = sadd.s32 %s175, 1
    %s177 = scalar_select %p174, %s175, %s176
    %p180 = pneg %p174
    %p181 = scmp.eq.s32.totalorder %s13, 1
    %p182 = por %p180, %p181
    %p183 = scmp.ne.s32.totalorder %s175, %s178
    %p184 = scmp.eq.s32.totalorder %s13, 0
    %p185 = por %p183, %p184
    %p186 = scmp.ne.s32.totalorder %s175, %s178
    %p187 = scmp.eq.s32.totalorder %s18, 1
    %p188 = por %p186, %p187
    %p189 = scmp.ne.s32.totalorder %s178, %s179
    %p190 = scmp.eq.s32.totalorder %s18, 0
    %p191 = por %p189, %p190
    %p192 = scmp.ne.s32.totalorder %s178, %s179
    %p193 = scmp.eq.s32.totalorder %s19, 1
    %p194 = por %p192, %p193
    %p196 = scmp.ne.s32.totalorder %s179, %s195
    %p197 = scmp.eq.s32.totalorder %s19, 0
    %p198 = por %p196, %p197
    %p199 = scmp.le.s32.totalorder 1, %s13
    %p200 = scmp.lt.s32.totalorder %s13, 3
    %p201 = pnand %p199, %p200
    %p202 = pneg %p201
    // Predicated region
    $region9: #{_lambda_.1} parent=5 // pred_check
      _
    $region10: #{_lambda_.1} parent=5 // pred_check_branch
      %204 = sbr.rel (%p201) target = $region12
    $region11: #{_lambda_.1} parent=5 // pred_region
      %s205 = ssub.s32 %s13, 1
      // Predicated region
      $region13: #{_lambda_.1} parent=11 // pred_check
        %p206 = pneg %p60
      $region14: #{_lambda_.1} parent=11 // pred_check_branch
        %208 = sbr.rel (%p206) target = $region16
      $region15: #{_lambda_.1} parent=11 // pred_region
        _
      $region16: #{_lambda_.1} parent=11 // pred_fallthru
        _
      // Predicated region
      $region17: #{_lambda_.1} parent=11 // pred_check
        %p209 = pneg %p81
      $region18: #{_lambda_.1} parent=11 // pred_check_branch
        %211 = sbr.rel (%p209) target = $region20
      $region19: #{_lambda_.1} parent=11 // pred_region
        _
      $region20: #{_lambda_.1} parent=11 // pred_fallthru
        _
      // Predicated region
      $region21: #{_lambda_.1} parent=11 // pred_check
        %p212 = pneg %p102
      $region22: #{_lambda_.1} parent=11 // pred_check_branch
        %214 = sbr.rel (%p212) target = $region24
      $region23: #{_lambda_.1} parent=11 // pred_region
        _
      $region24: #{_lambda_.1} parent=11 // pred_fallthru
        _
      // Predicated region
      $region25: #{_lambda_.1} parent=11 // pred_check
        %p215 = pneg %p123
      $region26: #{_lambda_.1} parent=11 // pred_check_branch
        %217 = sbr.rel (%p215) target = $region28
      $region27: #{_lambda_.1} parent=11 // pred_region
        _
      $region28: #{_lambda_.1} parent=11 // pred_fallthru
        _
      // Predicated region
      $region29: #{_lambda_.1} parent=11 // pred_check
        %p218 = pneg %p144
      $region30: #{_lambda_.1} parent=11 // pred_check_branch
        %220 = sbr.rel (%p218) target = $region32
      $region31: #{_lambda_.1} parent=11 // pred_region
        _
      $region32: #{_lambda_.1} parent=11 // pred_fallthru
        _
      // Predicated region
      $region33: #{_lambda_.1} parent=11 // pred_check
        %p221 = pneg %p165
      $region34: #{_lambda_.1} parent=11 // pred_check_branch
        %223 = sbr.rel (%p221) target = $region36
      $region35: #{_lambda_.1} parent=11 // pred_region
        _
      $region36: #{_lambda_.1} parent=11 // pred_fallthru
        _
    $region12: #{_lambda_.1} parent=5 // pred_fallthru
      _
    %p224 = scmp.lt.s32.totalorder %s13, 2
    // Predicated region
    $region37: #{_lambda_.1} parent=5 // pred_check
      %p225 = pneg %p224
    $region38: #{_lambda_.1} parent=5 // pred_check_branch
      %227 = sbr.rel (%p225) target = $region40
    $region39: #{_lambda_.1} parent=5 // pred_region
      // Predicated region
      $region41: #{_lambda_.1} parent=39 // pred_check
        %p228 = pneg %p33
      $region42: #{_lambda_.1} parent=39 // pred_check_branch
        %230 = sbr.rel (%p228) target = $region44
      $region43: #{_lambda_.1} parent=39 // pred_region
        %p231 = scmp.lt.s32.totalorder %s13, 1
        %s232 = scalar_select %p231, %s13, 1
        %s233 = smul.addr %s232, 3
        %s234 = smul.addr %s233, 4
        %s235 = scalar_lea.vmem %s0, %s234
      $region44: #{_lambda_.1} parent=39 // pred_fallthru
        _
    $region40: #{_lambda_.1} parent=5 // pred_fallthru
      _
    %p236 = scmp.le.s32.totalorder 1, %s13
    %p237 = scmp.lt.s32.totalorder %s13, 3
    %p238 = pnand %p236, %p237
    %p239 = pneg %p238
    // Predicated region
    $region45: #{_lambda_.1} parent=5 // pred_check
      _
    $region46: #{_lambda_.1} parent=5 // pred_check_branch
      %241 = sbr.rel (%p238) target = $region48
    $region47: #{_lambda_.1} parent=5 // pred_region
      %s242 = ssub.s32 %s13, 1
      %p243 = scmp.lt.s32.totalorder %s18, 1
      %s244 = scalar_select %p243, %s18, 1
      %s245 = smul.addr %s244, 3
      %s246 = smul.addr %s245, 4
      %s247 = scalar_lea.vmem %s0, %s246
      %p248 = pneg %p39
      %p249 = pneg %p36
      %p250 = pneg %p60
      %p251 = pneg %p57
      %p252 = pneg %p81
      %p253 = pneg %p78
      %p254 = pneg %p102
      %p255 = pneg %p99
      %p256 = pneg %p123
      %p257 = pneg %p120
      %p258 = pneg %p144
      %p259 = pneg %p141
      %p260 = pneg %p165
      %p261 = pneg %p162
      %p262 = pneg %p191
      %p263 = pneg %p188
      %p264 = scmp.lt.s32.totalorder %s18, 1
      %s265 = scalar_select %p264, %s18, 1
      %s266 = smul.addr %s265, 2
      %s267 = smul.addr %s266, 8
      %s268 = scalar_lea.vmem %s7, %s267
      %p269 = scmp.lt.s32.totalorder %s18, 1
      %s270 = scalar_select %p269, %s18, 1
      %s271 = smul.addr %s270, 3
      %s272 = smul.addr %s271, 4
      %s273 = scalar_lea.vmem %s0, %s272
      %p274 = scmp.lt.s32.totalorder %s18, 1
      %s275 = scalar_select %p274, %s18, 1
      %s276 = smul.addr %s275, 2
      %s277 = smul.addr %s276, 8
      %s278 = scalar_lea.vmem %s7, %s277
      %v282 = vlaneseq
      %v283 = vand.u32 %v282, 127
      %v284 = vadd.s32 %v283, 128
      %vm285 = vcmp.lt.s32.totalorder %v283, 0
      %v286 = vsub.s32 0, %v283
      %v287 = vsel %vm285, %v286, %v283
      %v288 = vshrl.u32 %v287, 4
      %v289 = vand.u32 %v287, 15
      %v290 = vsub.s32 0, %v289
      %v291 = vsel %vm285, %v290, %v289
      %vm292 = vcmp.lt.s32.totalorder %v284, 0
      %v293 = vsub.s32 0, %v284
      %v294 = vsel %vm292, %v293, %v284
      %v295 = vshrl.u32 %v294, 4
      %v296 = vand.u32 %v294, 15
      %v297 = vsub.s32 0, %v296
      %v298 = vsel %vm292, %v297, %v296
      %vm299 = vcmp.ne.s32.totalorder %v291, 0
      %vm300 = vcmp.ne.s32.totalorder %v298, 0
      %vm301 = vcmp.lt.s32.totalorder %v291, 0
      %vm302 = vcmp.lt.s32.totalorder %v298, 0
      %vm303 = vmand %vm301, %vm299
      %vm304 = vmand %vm302, %vm300
      %v305 = vadd.s32 %v291, 16
      %v306 = vadd.s32 %v298, 16
      %v307 = vsel %vm303, %v305, %v291
      %v308 = vsel %vm304, %v306, %v298
      %vm309 = vcmp.ne.s32.totalorder %v307, 0
      %vm310 = vcmp.ne.s32.totalorder %v308, 0
      %vm311 = vcmp.ne.s32.totalorder %v307, 15
      %vm312 = vcmp.ne.s32.totalorder %v308, 15
      %v313 = vld [vmem:[%s273] sm:$0xff]
      %v314 = vsel %vm309, 1, 0
      %v315 = vsel %vm310, 1, 0
      %vm316 = vcmp.eq.s32.totalorder %v314, 1
      %vm317 = vcmp.eq.s32.totalorder %v315, 1
      %v319 = vcombine.high %v313, %v313
      %v321 = vsel %vm316, %v313, 0.0
      %v322 = vsel %vm317, %v319, 0.0
      %v323 = vpack.c.bf16 %v321, %v321
      %v324 = vpack.c.bf16 %v322, %v322
      %v327 = vunpack.c.l.b16 %v323
      %v328 = vunpack.c.l.b16 %v324
      %v329 = vpack.c.b16 %v328, %v327
      %331 = vst [vmem:[#allocation2] sm:$0x33] %v329
      %v332 = vld [vmem:[%s273] sm:$0xff]
      %v333 = vld [vmem:[%s273 + $0x8] sm:$0xf]
      %v335 = vcombine.high %v332, %v332
      %v337 = vpack.c.bf16 %v332, %v332
      %v338 = vpack.c.bf16 %v335, %v335
      %v339 = vpack.c.bf16 %v333, %v333
      %v343 = vunpack.c.l.b16 %v337
      %v344 = vunpack.c.l.b16 %v338
      %v345 = vunpack.c.l.b16 %v339
      %v346 = vpack.c.b16 %v344, %v343
      %v347 = vpack.c.b16 %v345, %v345
      %v348 = vrot.slane %v346, 6
      %v349 = vrot.slane %v347, 6
      %350 = vrot.lane.b32.xlu0 %v348, 127
      %v351 = vpop.permute.xlu0 %350
      %352 = vrot.lane.b32.xlu0 %v349, 127
      %v353 = vpop.permute.xlu0 %352
      %v354 = vrot.slane %v351, 4
      %v355 = vrot.slane %v353, 4
      %vm356 = vcmask 1043456
      %v357 = vsel %vm356, %v354, %v355
      %vm358 = vcmask 1039360
      %v359 = vsel %vm358, %v351, %v357
      %361 = vst [vmem:[#allocation2] sm:$0xcc] %v359
      %v362 = vld [vmem:[%s273] sm:$0xff]
      %v363 = vld [vmem:[%s273 + $0x8] sm:$0xf]
      %v364 = vsel %vm311, 1, 0
      %v365 = vsel %vm312, 1, 0
      %vm366 = vcmp.eq.s32.totalorder %v364, 1
      %vm367 = vcmp.eq.s32.totalorder %v365, 1
      %v370 = vcombine.high %v362, %v362
      %371 = vrot.lane.b32.xlu0 %v362, 126
      %v372 = vpop.permute.xlu0 %371
      %373 = vrot.lane.b32.xlu0 %v370, 126
      %v374 = vpop.permute.xlu0 %373
      %375 = vrot.lane.b32.xlu0 %v363, 126
      %v376 = vpop.permute.xlu0 %375
      %vm377 = vcmask 1031168
      %v378 = vsel %vm377, %v372, %v374
      %v379 = vsel %vm377, %v374, %v376
      %v382 = vsel %vm366, %v378, 0.0
      %v383 = vsel %vm367, %v379, 0.0
      %v384 = vpack.c.bf16 %v382, %v382
      %v385 = vpack.c.bf16 %v383, %v383
      %v388 = vunpack.c.l.b16 %v384
      %v389 = vunpack.c.l.b16 %v385
      %v390 = vpack.c.b16 %v389, %v388
      %392 = vst [vmem:[#allocation2 + $0x8] sm:$0x33] %v390
      %v393 = vld [vmem:[%s273] sm:$0xff]
      %v394 = vld [vmem:[%s273 + $0x8] sm:$0xf]
      %v397 = vcombine.high %v393, %v393
      %398 = vrot.lane.b32.xlu0 %v393, 112
      %v399 = vpop.permute.xlu0 %398
      %400 = vrot.lane.b32.xlu0 %v397, 112
      %v401 = vpop.permute.xlu0 %400
      %402 = vrot.lane.b32.xlu0 %v394, 112
      %v403 = vpop.permute.xlu0 %402
      %vm404 = vcmask 916480
      %v405 = vsel %vm404, %v399, %v401
      %v406 = vsel %vm404, %v401, %v403
      %v409 = vsel %vm316, %v405, 0.0
      %v410 = vsel %vm317, %v406, 0.0
      %v411 = vpack.c.bf16 %v409, %v409
      %v412 = vpack.c.bf16 %v410, %v410
      %v415 = vunpack.c.l.b16 %v411
      %v416 = vunpack.c.l.b16 %v412
      %v417 = vpack.c.b16 %v416, %v415
      %v418 = vrot.slane %v417, 6
      %420 = vst [vmem:[#allocation2 + $0x8] sm:$0xcc] %v418
      %v421 = vld [vmem:[%s273] sm:$0xff]
      %v422 = vld [vmem:[%s273 + $0x8] sm:$0xf]
      %v424 = vcombine.high %v421, %v421
      %v426 = vpack.c.bf16 %v421, %v421
      %v427 = vpack.c.bf16 %v424, %v424
      %v428 = vpack.c.bf16 %v422, %v422
      %v432 = vunpack.c.l.b16 %v426
      %v433 = vunpack.c.l.b16 %v427
      %v434 = vunpack.c.l.b16 %v428
      %v435 = vpack.c.b16 %v433, %v432
      %v436 = vpack.c.b16 %v434, %v434
      %437 = vrot.lane.b32.xlu0 %v435, 111
      %v438 = vpop.permute.xlu0 %437
      %439 = vrot.lane.b32.xlu0 %v436, 111
      %v440 = vpop.permute.xlu0 %439
      %v441 = vrot.slane %v438, 4
      %v442 = vrot.slane %v440, 4
      %v443 = vsel %vm356, %v441, %v442
      %vm444 = vcmask 908288
      %v445 = vsel %vm444, %v438, %v443
      %447 = vst [vmem:[#allocation2 + $0x10] sm:$0x33] %v445
      %v448 = vld [vmem:[%s273] sm:$0xff]
      %v449 = vld [vmem:[%s273 + $0x8] sm:$0xf]
      %v452 = vcombine.high %v448, %v448
      %453 = vrot.lane.b32.xlu0 %v448, 110
      %v454 = vpop.permute.xlu0 %453
      %455 = vrot.lane.b32.xlu0 %v452, 110
      %v456 = vpop.permute.xlu0 %455
      %457 = vrot.lane.b32.xlu0 %v449, 110
      %v458 = vpop.permute.xlu0 %457
      %vm459 = vcmask 900096
      %v460 = vsel %vm459, %v454, %v456
      %v461 = vsel %vm459, %v456, %v458
      %v464 = vsel %vm366, %v460, 0.0
      %v465 = vsel %vm367, %v461, 0.0
      %v466 = vpack.c.bf16 %v464, %v464
      %v467 = vpack.c.bf16 %v465, %v465
      %v470 = vunpack.c.l.b16 %v466
      %v471 = vunpack.c.l.b16 %v467
      %v472 = vpack.c.b16 %v471, %v470
      %v473 = vrot.slane %v472, 6
      %475 = vst [vmem:[#allocation2 + $0x10] sm:$0xcc] %v473
      %v476 = vld [vmem:[%s273] sm:$0xff]
      %v477 = vld [vmem:[%s273 + $0x8] sm:$0xf]
      %v480 = vcombine.high %v476, %v476
      %481 = vrot.lane.b32.xlu0 %v476, 96
      %v482 = vpop.permute.xlu0 %481
      %483 = vrot.lane.b32.xlu0 %v480, 96
      %v484 = vpop.permute.xlu0 %483
      %485 = vrot.lane.b32.xlu0 %v477, 96
      %v486 = vpop.permute.xlu0 %485
      %vm487 = vcmask 785408
      %v488 = vsel %vm487, %v482, %v484
      %v489 = vsel %vm487, %v484, %v486
      %v492 = vsel %vm316, %v488, 0.0
      %v493 = vsel %vm317, %v489, 0.0
      %v494 = vpack.c.bf16 %v492, %v492
      %v495 = vpack.c.bf16 %v493, %v493
      %v498 = vunpack.c.l.b16 %v494
      %v499 = vunpack.c.l.b16 %v495
      %v500 = vpack.c.b16 %v499, %v498
      %502 = vst [vmem:[#allocation2 + $0x18] sm:$0x33] %v500
      %v503 = vld [vmem:[%s273] sm:$0xff]
      %v504 = vld [vmem:[%s273 + $0x8] sm:$0xf]
      %v506 = vcombine.high %v503, %v503
      %v508 = vpack.c.bf16 %v503, %v503
      %v509 = vpack.c.bf16 %v506, %v506
      %v510 = vpack.c.bf16 %v504, %v504
      %v514 = vunpack.c.l.b16 %v508
      %v515 = vunpack.c.l.b16 %v509
      %v516 = vunpack.c.l.b16 %v510
      %v517 = vpack.c.b16 %v515, %v514
      %v518 = vpack.c.b16 %v516, %v516
      %v519 = vrot.slane %v517, 6
      %v520 = vrot.slane %v518, 6
      %521 = vrot.lane.b32.xlu0 %v519, 95
      %v522 = vpop.permute.xlu0 %521
      %523 = vrot.lane.b32.xlu0 %v520, 95
      %v524 = vpop.permute.xlu0 %523
      %v525 = vrot.slane %v522, 4
      %v526 = vrot.slane %v524, 4
      %v527 = vsel %vm356, %v525, %v526
      %vm528 = vcmask 777216
      %v529 = vsel %vm528, %v522, %v527
      %531 = vst [vmem:[#allocation2 + $0x18] sm:$0xcc] %v529
      %v532 = vld [vmem:[%s273] sm:$0xff]
      %v533 = vld [vmem:[%s273 + $0x8] sm:$0xf]
      %v536 = vcombine.high %v532, %v532
      %537 = vrot.lane.b32.xlu0 %v532, 94
      %v538 = vpop.permute.xlu0 %537
      %539 = vrot.lane.b32.xlu0 %v536, 94
      %v540 = vpop.permute.xlu0 %539
      %541 = vrot.lane.b32.xlu0 %v533, 94
      %v542 = vpop.permute.xlu0 %541
      %vm543 = vcmask 769024
      %v544 = vsel %vm543, %v538, %v540
      %v545 = vsel %vm543, %v540, %v542
      %v548 = vsel %vm366, %v544, 0.0
      %v549 = vsel %vm367, %v545, 0.0
      %v550 = vpack.c.bf16 %v548, %v548
      %v551 = vpack.c.bf16 %v549, %v549
      %v554 = vunpack.c.l.b16 %v550
      %v555 = vunpack.c.l.b16 %v551
      %v556 = vpack.c.b16 %v555, %v554
      %558 = vst [vmem:[#allocation2 + $0x20] sm:$0x33] %v556
      %v559 = vld [vmem:[#allocation2] sm:$0xff]
      %v560 = vld [vmem:[#allocation2 + $0x8] sm:$0xff]
      %v561 = vld [vmem:[#allocation2 + $0x10] sm:$0xff]
      %v562 = vld [vmem:[#allocation2 + $0x18] sm:$0xff]
      %v563 = vld [vmem:[#allocation2 + $0x20] sm:$0x33]
      %v564 = vld [vmem:[%s1] sm:$0xf]
      %v570 = vunpack.c.l.b16 %v559
      %v571 = vunpack.c.h.b16 %v559
      %v572 = vunpack.c.l.b16 %v560
      %v573 = vunpack.c.h.b16 %v560
      %v574 = vunpack.c.l.b16 %v561
      %v575 = vunpack.c.h.b16 %v561
      %v576 = vunpack.c.l.b16 %v562
      %v577 = vunpack.c.h.b16 %v562
      %v578 = vunpack.c.l.b16 %v563
      %v579 = vunpack.c.h.b16 %v563
      %v580 = vpack.c.b16 %v572, %v570
      %v581 = vpack.c.b16 %v573, %v571
      %v582 = vpack.c.b16 %v576, %v574
      %v583 = vpack.c.b16 %v577, %v575
      %v584 = vpack.c.b16 %v578, %v578
      %v585 = vpack.c.b16 %v579, %v579
      %vm590 = vcmask 293888
      %v592 = vsel %vm590, %v564, 0
      %vm594 = vcmask 1041408
      %v596 = vsel %vm594, %v584, 0
      %v599 = vsel %vm594, %v585, 0
      %601 = vmatprep.subr.bf16.mxu0 %v581
      %602 = vmatpush1.bf16.msra.mxu0 %v580
      %603 = vmatprep.subr.bf16.mxu0 %v583
      %604 = vmatpush1.bf16.msra.mxu0 %v582
      %605 = vmatprep.subr.bf16.mxu0 %v599
      %606 = vmatpush1.bf16.msra.mxu0 %v596
      %607 = vmatprep.subr.bf16.mxu0 0
      %608 = vmatpush1.bf16.msra.mxu0 0
      %609 = vmatprep.subr.bf16.mxu0 0
      %610 = vmatpush1.bf16.msra.mxu0 0
      %611 = vmatprep.subr.bf16.mxu0 0
      %612 = vmatpush1.bf16.msra.mxu0 0
      %613 = vmatprep.subr.bf16.mxu0 0
      %614 = vmatpush1.bf16.msra.mxu0 0
      %615 = vmatprep.subr.bf16.mxu0 0
      %616 = vmatpush1.bf16.msra.mxu0 0
      %617 = vmatprep.subr.bf16.mxu0 0
      %618 = vmatpush1.bf16.msra.mxu0 0
      %619 = vmatprep.subr.bf16.mxu0 0
      %620 = vmatpush1.bf16.msra.mxu0 0
      %621 = vmatprep.subr.bf16.mxu0 0
      %622 = vmatpush1.bf16.msra.mxu0 0
      %623 = vmatprep.subr.bf16.mxu0 0
      %624 = vmatpush1.bf16.msra.mxu0 0
      %625 = vmatprep.subr.bf16.mxu0 0
      %626 = vmatpush1.bf16.msra.mxu0 0
      %627 = vmatprep.subr.bf16.mxu0 0
      %628 = vmatpush1.bf16.msra.mxu0 0
      %629 = vmatprep.subr.bf16.mxu0 0
      %630 = vmatpush1.bf16.msra.mxu0 0
      %631 = vmatprep.subr.bf16.mxu0 0
      %632 = vmatpush1.bf16.msra.mxu0 0
      %633 = vmatprep.mubr.bf16.mxu0 0
      %634 = vmatmul.mubr.bf16.gmra.mrb[0].mxu0 %v592
      %v635 = vpop.f32.mrb[0].mxu0
      %v636 = vadd.f32 0.0, %v635
      %v637 = vpop.f32.mrb[0].mxu0
      %v638 = vadd.f32 0.0, %v637
      %v639 = vpop.f32.mrb[0].mxu0
      %v640 = vpop.f32.mrb[0].mxu0
      %641 = vdwg.mxu0
      %v642 = vld [vmem:[%s2] sm:$0xff]
      %644 = vset.pattern.permute.xlu0 0
      %645 = vperm.xlu0 %644, %v642
      %v646 = vpop.permute.xlu0 %645
      %v648 = vmul.f32 %v636, %v646
      %v649 = vmul.f32 %v638, %v646
      %v650 = vld [vmem:[%s3] sm:$0xff]
      %652 = vset.pattern.permute.xlu0 0
      %653 = vperm.xlu0 %652, %v650
      %v654 = vpop.permute.xlu0 %653
      %v656 = vadd.f32 %v648, %v654
      %v657 = vadd.f32 %v649, %v654
      %v658 = vmax.f32 %v656, 0.0
      %v659 = vmax.f32 %v657, 0.0
      %660 = vst [vmem:[#allocation4] sm:$0xff] 0
      %vm661 = vcmask 273408
      %662 = vst.msk [vmem:[#allocation4 + $0x8] sm:$0xf] %vm661, 0
      %v663 = vpack.c.bf16 %v658, %v658
      %v664 = vpack.c.bf16 %v659, %v659
      %v667 = vunpack.c.l.b16 %v663
      %v668 = vunpack.c.l.b16 %v664
      %v669 = vpack.c.b16 %v668, %v667
      %670 = vrot.lane.b32.xlu0 %v669, 17
      %v671 = vpop.permute.xlu0 %670
      %v672 = vrot.slane %v671, 4
      %vm673 = vcmask 138240
      %v674 = vsel %vm673, %v672, %v671
      %vm677 = vcmask 1043592
      %vm678 = vcmask 1047556
      %vm679 = vmor %vm678, %vm677
      %680 = vst.msk [vmem:[#allocation4] sm:$0xff] %vm679, %v674
      %vm681 = vcmask 134144
      %682 = vst.msk [vmem:[#allocation4 + $0x8] sm:$0xf] %vm681, %v672
      %v683 = vld [vmem:[#allocation4] sm:$0xff]
      %vm684 = vmpackc.low %vm317, %vm316
      %v685 = vsel %vm684, %v683, 0
      %686 = vst [vmem:[#allocation3] sm:$0xff] %v685
      %v687 = vld [vmem:[#allocation4] sm:$0xff]
      %v688 = vld [vmem:[#allocation4 + $0x8] sm:$0xf]
      %691 = vrot.lane.b32.xlu0 %v687, 127
      %v692 = vpop.permute.xlu0 %691
      %693 = vrot.lane.b32.xlu0 %v688, 127
      %v694 = vpop.permute.xlu0 %693
      %v695 = vrot.slane %v692, 4
      %v696 = vrot.slane %v694, 4
      %v697 = vsel %vm356, %v695, %v696
      %v698 = vsel %vm358, %v692, %v697
      %700 = vst [vmem:[#allocation3 + $0x8] sm:$0xff] %v698
      %v701 = vld [vmem:[#allocation4] sm:$0xff]
      %v702 = vld [vmem:[#allocation4 + $0x8] sm:$0xf]
      %vm703 = vmpackc.low %vm367, %vm366
      %v704 = vsel %vm703, 65537, 0
      %705 = vrot.lane.b32.xlu0 %v704, 2
      %v706 = vpop.permute.xlu0 %705
      %v707 = vrot.slane %v706, 4
      %vm708 = vcmask 15360
      %v709 = vsel %vm708, %v707, %v706
      %vm710 = vcmp.ne.s16.totalorder %v709, 0
      %vm711 = vcmp.ne.s16.totalorder %v707, 0
      %v712 = vsel %vm710, %v701, 0
      %v713 = vsel %vm711, %v702, 0
      %716 = vrot.lane.b32.xlu0 %v712, 126
      %v717 = vpop.permute.xlu0 %716
      %718 = vrot.lane.b32.xlu0 %v713, 126
      %v719 = vpop.permute.xlu0 %718
      %v720 = vrot.slane %v717, 4
      %v721 = vrot.slane %v719, 4
      %v722 = vsel %vm356, %v720, %v721
      %vm723 = vcmask 1031168
      %v724 = vsel %vm723, %v717, %v722
      %726 = vst [vmem:[#allocation3 + $0x10] sm:$0xff] %v724
      %v727 = vld [vmem:[#allocation4] sm:$0xff]
      %v728 = vld [vmem:[#allocation4 + $0x8] sm:$0xf]
      %v729 = vsel %vm684, 65537, 0
      %730 = vrot.lane.b32.xlu0 %v729, 16
      %v731 = vpop.permute.xlu0 %730
      %v732 = vrot.slane %v731, 4
      %vm733 = vcmask 130048
      %v734 = vsel %vm733, %v732, %v731
      %vm735 = vcmp.ne.s16.totalorder %v734, 0
      %vm736 = vcmp.ne.s16.totalorder %v732, 0
      %v737 = vsel %vm735, %v727, 0
      %v738 = vsel %vm736, %v728, 0
      %741 = vrot.lane.b32.xlu0 %v737, 112
      %v742 = vpop.permute.xlu0 %741
      %743 = vrot.lane.b32.xlu0 %v738, 112
      %v744 = vpop.permute.xlu0 %743
      %v745 = vrot.slane %v742, 4
      %v746 = vrot.slane %v744, 4
      %v747 = vsel %vm356, %v745, %v746
      %vm748 = vcmask 916480
      %v749 = vsel %vm748, %v742, %v747
      %751 = vst [vmem:[#allocation3 + $0x18] sm:$0xff] %v749
      %v752 = vld [vmem:[#allocation4] sm:$0xff]
      %v753 = vld [vmem:[#allocation4 + $0x8] sm:$0xf]
      %756 = vrot.lane.b32.xlu0 %v752, 111
      %v757 = vpop.permute.xlu0 %756
      %758 = vrot.lane.b32.xlu0 %v753, 111
      %v759 = vpop.permute.xlu0 %758
      %v760 = vrot.slane %v757, 4
      %v761 = vrot.slane %v759, 4
      %v762 = vsel %vm356, %v760, %v761
      %v763 = vsel %vm444, %v757, %v762
      %765 = vst [vmem:[#allocation3 + $0x20] sm:$0xff] %v763
      %v766 = vld [vmem:[#allocation4] sm:$0xff]
      %v767 = vld [vmem:[#allocation4 + $0x8] sm:$0xf]
      %768 = vrot.lane.b32.xlu0 %v704, 18
      %v769 = vpop.permute.xlu0 %768
      %v770 = vrot.slane %v769, 4
      %vm771 = vcmask 146432
      %v772 = vsel %vm771, %v770, %v769
      %vm773 = vcmp.ne.s16.totalorder %v772, 0
      %vm774 = vcmp.ne.s16.totalorder %v770, 0
      %v775 = vsel %vm773, %v766, 0
      %v776 = vsel %vm774, %v767, 0
      %779 = vrot.lane.b32.xlu0 %v775, 110
      %v780 = vpop.permute.xlu0 %779
      %781 = vrot.lane.b32.xlu0 %v776, 110
      %v782 = vpop.permute.xlu0 %781
      %v783 = vrot.slane %v780, 4
      %v784 = vrot.slane %v782, 4
      %v785 = vsel %vm356, %v783, %v784
      %vm786 = vcmask 900096
      %v787 = vsel %vm786, %v780, %v785
      %789 = vst [vmem:[#allocation3 + $0x28] sm:$0xff] %v787
      %v790 = vld [vmem:[#allocation4] sm:$0xff]
      %v791 = vld [vmem:[#allocation4 + $0x8] sm:$0xf]
      %792 = vrot.lane.b32.xlu0 %v729, 32
      %v793 = vpop.permute.xlu0 %792
      %v794 = vrot.slane %v793, 4
      %vm795 = vcmask 261120
      %v796 = vsel %vm795, %v794, %v793
      %vm797 = vcmp.ne.s16.totalorder %v796, 0
      %vm798 = vcmp.ne.s16.totalorder %v794, 0
      %v799 = vsel %vm797, %v790, 0
      %v800 = vsel %vm798, %v791, 0
      %803 = vrot.lane.b32.xlu0 %v799, 96
      %v804 = vpop.permute.xlu0 %803
      %805 = vrot.lane.b32.xlu0 %v800, 96
      %v806 = vpop.permute.xlu0 %805
      %v807 = vrot.slane %v804, 4
      %v808 = vrot.slane %v806, 4
      %v809 = vsel %vm356, %v807, %v808
      %vm810 = vcmask 785408
      %v811 = vsel %vm810, %v804, %v809
      %813 = vst [vmem:[#allocation3 + $0x30] sm:$0xff] %v811
      %v814 = vld [vmem:[#allocation4] sm:$0xff]
      %v815 = vld [vmem:[#allocation4 + $0x8] sm:$0xf]
      %818 = vrot.lane.b32.xlu0 %v814, 95
      %v819 = vpop.permute.xlu0 %818
      %820 = vrot.lane.b32.xlu0 %v815, 95
      %v821 = vpop.permute.xlu0 %820
      %v822 = vrot.slane %v819, 4
      %v823 = vrot.slane %v821, 4
      %v824 = vsel %vm356, %v822, %v823
      %v825 = vsel %vm528, %v819, %v824
      %827 = vst [vmem:[#allocation3 + $0x38] sm:$0xff] %v825
      %v828 = vld [vmem:[#allocation4] sm:$0xff]
      %v829 = vld [vmem:[#allocation4 + $0x8] sm:$0xf]
      %830 = vrot.lane.b32.xlu0 %v704, 34
      %v831 = vpop.permute.xlu0 %830
      %v832 = vrot.slane %v831, 4
      %vm833 = vcmask 277504
      %v834 = vsel %vm833, %v832, %v831
      %vm835 = vcmp.ne.s16.totalorder %v834, 0
      %vm836 = vcmp.ne.s16.totalorder %v832, 0
      %v837 = vsel %vm835, %v828, 0
      %v838 = vsel %vm836, %v829, 0
      %841 = vrot.lane.b32.xlu0 %v837, 94
      %v842 = vpop.permute.xlu0 %841
      %843 = vrot.lane.b32.xlu0 %v838, 94
      %v844 = vpop.permute.xlu0 %843
      %v845 = vrot.slane %v842, 4
      %v846 = vrot.slane %v844, 4
      %v847 = vsel %vm356, %v845, %v846
      %vm848 = vcmask 769024
      %v849 = vsel %vm848, %v842, %v847
      %851 = vst [vmem:[#allocation3 + $0x40] sm:$0xff] %v849
      %v852 = vld [vmem:[#allocation3] sm:$0xff]
      %v853 = vld [vmem:[#allocation3 + $0x8] sm:$0xff]
      %v854 = vld [vmem:[#allocation3 + $0x10] sm:$0xff]
      %v855 = vld [vmem:[#allocation3 + $0x18] sm:$0xff]
      %v856 = vld [vmem:[#allocation3 + $0x20] sm:$0xff]
      %v857 = vld [vmem:[#allocation3 + $0x28] sm:$0xff]
      %v858 = vld [vmem:[#allocation3 + $0x30] sm:$0xff]
      %v859 = vld [vmem:[#allocation3 + $0x38] sm:$0xff]
      %v860 = vld [vmem:[#allocation3 + $0x40] sm:$0xff]
      %v861 = vld [vmem:[%s4] sm:$0xf]
      %v871 = vunpack.c.l.b16 %v852
      %v872 = vunpack.c.h.b16 %v852
      %v873 = vunpack.c.l.b16 %v853
      %v874 = vunpack.c.h.b16 %v853
      %v875 = vunpack.c.l.b16 %v854
      %v876 = vunpack.c.h.b16 %v854
      %v877 = vunpack.c.l.b16 %v855
      %v878 = vunpack.c.h.b16 %v855
      %v879 = vunpack.c.l.b16 %v856
      %v880 = vunpack.c.h.b16 %v856
      %v881 = vunpack.c.l.b16 %v857
      %v882 = vunpack.c.h.b16 %v857
      %v883 = vunpack.c.l.b16 %v858
      %v884 = vunpack.c.h.b16 %v858
      %v885 = vunpack.c.l.b16 %v859
      %v886 = vunpack.c.h.b16 %v859
      %v887 = vunpack.c.l.b16 %v860
      %v888 = vunpack.c.h.b16 %v860
      %v889 = vpack.c.b16 %v873, %v871
      %v890 = vpack.c.b16 %v874, %v872
      %v891 = vpack.c.b16 %v877, %v875
      %v892 = vpack.c.b16 %v878, %v876
      %v893 = vpack.c.b16 %v881, %v879
      %v894 = vpack.c.b16 %v882, %v880
      %v895 = vpack.c.b16 %v885, %v883
      %v896 = vpack.c.b16 %v886, %v884
      %v897 = vpack.c.b16 %v887, %v887
      %v898 = vpack.c.b16 %v888, %v888
      %vm907 = vcmask 588800
      %v909 = vsel %vm907, %v861, 0
      %vm911 = vcmask 1043456
      %v913 = vsel %vm911, %v897, 0
      %v916 = vsel %vm911, %v898, 0
      %918 = vmatprep.subr.bf16.mxu0 %v890
      %919 = vmatpush1.bf16.msra.mxu0 %v889
      %920 = vmatprep.subr.bf16.mxu0 %v892
      %921 = vmatpush1.bf16.msra.mxu0 %v891
      %922 = vmatprep.subr.bf16.mxu0 %v894
      %923 = vmatpush1.bf16.msra.mxu0 %v893
      %924 = vmatprep.subr.bf16.mxu0 %v896
      %925 = vmatpush1.bf16.msra.mxu0 %v895
      %926 = vmatprep.subr.bf16.mxu0 %v916
      %927 = vmatpush1.bf16.msra.mxu0 %v913
      %928 = vmatprep.subr.bf16.mxu0 0
      %929 = vmatpush1.bf16.msra.mxu0 0
      %930 = vmatprep.subr.bf16.mxu0 0
      %931 = vmatpush1.bf16.msra.mxu0 0
      %932 = vmatprep.subr.bf16.mxu0 0
      %933 = vmatpush1.bf16.msra.mxu0 0
      %934 = vmatprep.subr.bf16.mxu0 0
      %935 = vmatpush1.bf16.msra.mxu0 0
      %936 = vmatprep.subr.bf16.mxu0 0
      %937 = vmatpush1.bf16.msra.mxu0 0
      %938 = vmatprep.subr.bf16.mxu0 0
      %939 = vmatpush1.bf16.msra.mxu0 0
      %940 = vmatprep.subr.bf16.mxu0 0
      %941 = vmatpush1.bf16.msra.mxu0 0
      %942 = vmatprep.subr.bf16.mxu0 0
      %943 = vmatpush1.bf16.msra.mxu0 0
      %944 = vmatprep.subr.bf16.mxu0 0
      %945 = vmatpush1.bf16.msra.mxu0 0
      %946 = vmatprep.subr.bf16.mxu0 0
      %947 = vmatpush1.bf16.msra.mxu0 0
      %948 = vmatprep.subr.bf16.mxu0 0
      %949 = vmatpush1.bf16.msra.mxu0 0
      %950 = vmatprep.mubr.bf16.mxu0 0
      %951 = vmatmul.mubr.bf16.gmra.mrb[0].mxu0 %v909
      %v952 = vpop.f32.mrb[0].mxu0
      %v953 = vadd.f32 0.0, %v952
      %v954 = vpop.f32.mrb[0].mxu0
      %v955 = vadd.f32 0.0, %v954
      %v956 = vpop.f32.mrb[0].mxu0
      %v957 = vpop.f32.mrb[0].mxu0
      %958 = vdwg.mxu0
      %v959 = vld [vmem:[%s5] sm:$0xff]
      %961 = vset.pattern.permute.xlu0 0
      %962 = vperm.xlu0 %961, %v959
      %v963 = vpop.permute.xlu0 %962
      %v965 = vmul.f32 %v953, %v963
      %v966 = vmul.f32 %v955, %v963
      %v967 = vld [vmem:[%s6] sm:$0xff]
      %969 = vset.pattern.permute.xlu0 0
      %970 = vperm.xlu0 %969, %v967
      %v971 = vpop.permute.xlu0 %970
      %v973 = vadd.f32 %v965, %v971
      %v974 = vadd.f32 %v966, %v971
      %v975 = vmax.f32 %v973, 0.0
      %v976 = vmax.f32 %v974, 0.0
      %977 = vst [vmem:[%s278] sm:$0xff] %v975
      %978 = vst [vmem:[%s278 + $0x8] sm:$0xff] %v976
      %p979 = scmp.lt.s32.totalorder %s18, 1
      %s980 = scalar_select %p979, %s18, 1
      %s981 = smul.addr %s980, 2
      %s982 = smul.addr %s981, 8
      %s983 = scalar_lea.vmem %s7, %s982
      // Predicated region
      $region49: #{_lambda_.1} parent=47 // pred_check
        %p984 = pneg %p188
      $region50: #{_lambda_.1} parent=47 // pred_check_branch
        %986 = sbr.rel (%p984) target = $region52
      $region51: #{_lambda_.1} parent=47 // pred_region
        _
      $region52: #{_lambda_.1} parent=47 // pred_fallthru
        _
    $region48: #{_lambda_.1} parent=5 // pred_fallthru
      _
    %p987 = scmp.le.s32.totalorder 2, %s13
    // Predicated region
    $region53: #{_lambda_.1} parent=5 // pred_check
      %p988 = pneg %p987
    $region54: #{_lambda_.1} parent=5 // pred_check_branch
      %990 = sbr.rel (%p988) target = $region56
    $region55: #{_lambda_.1} parent=5 // pred_region
      %s991 = ssub.s32 %s13, 2
      // Predicated region
      $region57: #{_lambda_.1} parent=55 // pred_check
        %p992 = pneg %p194
      $region58: #{_lambda_.1} parent=55 // pred_check_branch
        %994 = sbr.rel (%p992) target = $region60
      $region59: #{_lambda_.1} parent=55 // pred_region
        %p995 = scmp.lt.s32.totalorder %s19, 1
        %s996 = scalar_select %p995, %s19, 1
        %s997 = smul.addr %s996, 2
        %s998 = smul.addr %s997, 8
        %s999 = scalar_lea.vmem %s7, %s998
      $region60: #{_lambda_.1} parent=55 // pred_fallthru
        _
    $region56: #{_lambda_.1} parent=5 // pred_fallthru
      _
  $region6: #{_lambda_.1} parent=0 // loop_footer
    %s17 = sadd.s32 1, %s13
  $region7: #{_lambda_.1} parent=0 // loop_footer_branch
    %12 = sbr.rel target = $region3
  $region8: #{_lambda_.1} parent=0 // loop_exit
    _

</llo_original>
